<compile_context>
chip_gen: v7x
topology: tpu7x:2x2x1
jax: 0.10.0
libtpu: 0.0.40
codegen_flags: <defaults>
</compile_context>

<pallas_src>
import jax
import jax.numpy as jnp
from jax.experimental import pallas as pl
from jax.experimental.pallas import tpu as pltpu


def _num_embedding_kernel(x_ref, col_ref, bias_ref, o_ref):
    # x_ref:    (TB, NC, 1)  numerical feature values for this batch tile
    # col_ref:  (NC, H)      numerical-column embeddings (VMEM-resident)
    # bias_ref: (1, H)       num_bias (VMEM-resident)
    # o_ref:    (TB, NC, H)  output embeddings for this batch tile
    x = x_ref[...].astype(jnp.float32)            # PyTorch: x_num_ts.float()
    col = col_ref[...].astype(jnp.float32)
    bias = bias_ref[...].astype(jnp.float32)

    # out[b, c, h] = col[c, h] * x[b, c] + bias[h]
    # x is (TB, NC, 1): broadcasting along the last (lane) dim only -> cheap
    # lane-broadcast FMA on the VPU, no cross-lane relayout.
    out = x * col[None, :, :] + bias[None, :, :]
    o_ref[...] = out.astype(o_ref.dtype)


def _choose_block_b(B, NC, H, out_itemsize):
    """Pick an output tile of ~4 MiB (8-aligned), with >=2 grid steps when B allows.

    4 MiB double-buffered output + VMEM-resident params fits comfortably under
    the scoped-VMEM default on every generation (16 MiB v5e, 32 MiB v6e/v7x).
    """
    row_bytes = max(1, NC * H * out_itemsize)
    target_bytes = 4 << 20
    bb = max(1, target_bytes // row_bytes)
    bb = min(bb, B)
    if bb >= 8:
        bb = (bb // 8) * 8                      # sublane-aligned
    if bb >= B and B >= 16:
        # Ensure at least 2 grid steps so the "parallel" axis can shard across
        # both v7x TensorCores and writeback overlaps with compute.
        half = -(-B // 2)                       # cdiv(B, 2)
        half = max(8, ((half + 7) // 8) * 8)
        bb = min(bb, half)
    return max(1, bb)


def transtab_num_embedding(num_col_emb, x_num_ts, num_bias, *,
                           block_b=None, out_dtype=None):
    """num_col_emb: (NC, H); x_num_ts: (B, NC); num_bias: (1, 1, H) -> (B, NC, H).

    out_dtype=None -> float32 (strict PyTorch `.float()` parity).  Pass e.g.
    jnp.bfloat16 to halve HBM writeback bytes (arithmetic stays f32).
    """
    B, NC = x_num_ts.shape
    NC2, H = num_col_emb.shape
    assert NC2 == NC, "num_col_emb / x_num_ts column count mismatch"

    if out_dtype is None:
        out_dtype = jnp.result_type(num_col_emb.dtype, num_bias.dtype, jnp.float32)
    out_itemsize = jnp.dtype(out_dtype).itemsize

    if block_b is None:
        block_b = _choose_block_b(B, NC, H, out_itemsize)

    x3 = x_num_ts.reshape(B, NC, 1)             # NC on sublane, lane dim is the broadcast dim
    bias2 = num_bias.reshape(1, H)

    grid = (pl.cdiv(B, block_b),)
    out = pl.pallas_call(
        _num_embedding_kernel,
        out_shape=jax.ShapeDtypeStruct((B, NC, H), out_dtype),
        grid=grid,
        in_specs=[
            pl.BlockSpec((block_b, NC, 1), lambda i: (i, 0, 0)),  # x tile moves with grid
            pl.BlockSpec((NC, H), lambda i: (0, 0)),              # col emb: VMEM-resident
            pl.BlockSpec((1, H), lambda i: (0, 0)),               # bias:    VMEM-resident
        ],
        out_specs=pl.BlockSpec((block_b, NC, H), lambda i: (i, 0, 0)),
        compiler_params=pltpu.CompilerParams(
            dimension_semantics=("parallel",)),
    )(x3, num_col_emb, bias2)
    return out


def _reference(num_col_emb, x_num_ts, num_bias):
    col = num_col_emb[None, :, :]                                   # (1, NC, H)
    return col * x_num_ts[:, :, None].astype(jnp.float32) + num_bias


if __name__ == "__main__":
    # Module config: hidden_dim=128 (lane-dense), 8 numerical columns, batch=16.
    hidden_dim = 128
    num_cols = 8
    batch = 16

    key = jax.random.PRNGKey(0)
    k_col, k_x, k_bias = jax.random.split(key, 3)

    num_col_emb = jax.random.normal(k_col, (num_cols, hidden_dim), dtype=jnp.float32)
    x_num_ts = jax.random.normal(k_x, (batch, num_cols), dtype=jnp.float32)
    bound = 1.0 / (hidden_dim ** 0.5)                   # nn_init.uniform_ bound
    num_bias = jax.random.uniform(k_bias, (1, 1, hidden_dim),
                                  minval=-bound, maxval=bound, dtype=jnp.float32)

    ref = _reference(num_col_emb, x_num_ts, num_bias)

    # Default (auto) tile selection: for B=16 this yields block_b=8 -> grid of 2
    # parallel steps, exercising the pipelined / megacore-shardable path.
    out = transtab_num_embedding(num_col_emb, x_num_ts, num_bias)
    out = jax.block_until_ready(out)
    assert out.shape == (batch, num_cols, hidden_dim)
    assert out.dtype == jnp.float32
    assert jnp.allclose(out, ref, atol=1e-5, rtol=1e-5), "f32 mismatch vs reference"

    # Optional reduced-writeback path: bf16 store, f32 arithmetic.
    out_bf16 = transtab_num_embedding(num_col_emb, x_num_ts, num_bias,
                                      out_dtype=jnp.bfloat16)
    out_bf16 = jax.block_until_ready(out_bf16)
    assert out_bf16.dtype == jnp.bfloat16
    assert jnp.allclose(out_bf16.astype(jnp.float32), ref, atol=3e-2, rtol=3e-2), \
        "bf16 mismatch vs reference"

    print("KERNEL_OK")
</pallas_src>

<mosaic_0001>
module attributes {stable_mosaic.version = 11 : i64} {
  func.func @_num_embedding_kernel(%arg0: i32, %arg1: memref<8x8x1xf32, #tpu.memory_space<vmem>>, %arg2: memref<8x128xf32, #tpu.memory_space<vmem>>, %arg3: memref<1x128xf32, #tpu.memory_space<vmem>>, %arg4: memref<8x8x128xf32, #tpu.memory_space<vmem>>) attributes {dimension_semantics = [#tpu.dimension_semantics<parallel>], iteration_bounds = array<i64: 2>, scalar_prefetch = 0 : i64, scratch_operands = 0 : i64, tpu.core_type = #tpu.core_type<tc>, window_params = [{transform_indices = @transform_0, window_bounds = array<i64: 8, 8, 1>}, {pipeline_mode = #tpu.pipeline_mode<synchronous>, transform_indices = @transform_1, window_bounds = array<i64: 8, 128>}, {pipeline_mode = #tpu.pipeline_mode<synchronous>, transform_indices = @transform_2, window_bounds = array<i64: 1, 128>}, {transform_indices = @transform_3, window_bounds = array<i64: 8, 8, 128>}]} {
    %c0 = arith.constant 0 : index
    %c0_0 = arith.constant 0 : index
    %c0_1 = arith.constant 0 : index
    %0 = vector.load %arg1[%c0, %c0_0, %c0_1] : memref<8x8x1xf32, #tpu.memory_space<vmem>>, vector<8x8x1xf32>
    %c0_2 = arith.constant 0 : index
    %c0_3 = arith.constant 0 : index
    %1 = vector.load %arg2[%c0_2, %c0_3] : memref<8x128xf32, #tpu.memory_space<vmem>>, vector<8x128xf32>
    %c0_4 = arith.constant 0 : index
    %c0_5 = arith.constant 0 : index
    %2 = vector.load %arg3[%c0_4, %c0_5] : memref<1x128xf32, #tpu.memory_space<vmem>>, vector<1x128xf32>
    %3 = vector.shape_cast %1 : vector<8x128xf32> to vector<1x8x128xf32>
    %4 = vector.broadcast %0 : vector<8x8x1xf32> to vector<8x8x128xf32>
    %5 = vector.broadcast %3 : vector<1x8x128xf32> to vector<8x8x128xf32>
    %6 = arith.mulf %4, %5 : vector<8x8x128xf32>
    %7 = vector.shape_cast %2 : vector<1x128xf32> to vector<1x1x128xf32>
    %8 = vector.broadcast %7 : vector<1x1x128xf32> to vector<8x8x128xf32>
    %9 = arith.addf %6, %8 : vector<8x8x128xf32>
    %c0_6 = arith.constant 0 : index
    %c0_7 = arith.constant 0 : index
    %c0_8 = arith.constant 0 : index
    %10 = vector.load %arg4[%c0_6, %c0_7, %c0_8] : memref<8x8x128xf32, #tpu.memory_space<vmem>>, vector<8x8x128xf32>
    tpu.vector_store %arg4[%c0_6, %c0_7, %c0_8], %9 {strides = array<i32>} : memref<8x8x128xf32, #tpu.memory_space<vmem>>, vector<8x8x128xf32>,
    return
  }
  func.func @transform_0(%arg0: i32) -> (i32, i32, i32) {
    %c0_i32 = arith.constant 0 : i32
    %c0_i32_0 = arith.constant 0 : i32
    %c0_i32_1 = arith.constant 0 : i32
    return %arg0, %c0_i32, %c0_i32_0 : i32, i32, i32
  }
  func.func @transform_1(%arg0: i32) -> (i32, i32) {
    %c0_i32 = arith.constant 0 : i32
    %c0_i32_0 = arith.constant 0 : i32
    %c0_i32_1 = arith.constant 0 : i32
    return %c0_i32, %c0_i32_0 : i32, i32
  }
  func.func @transform_2(%arg0: i32) -> (i32, i32) {
    %c0_i32 = arith.constant 0 : i32
    %c0_i32_0 = arith.constant 0 : i32
    %c0_i32_1 = arith.constant 0 : i32
    return %c0_i32, %c0_i32_0 : i32, i32
  }
  func.func @transform_3(%arg0: i32) -> (i32, i32, i32) {
    %c0_i32 = arith.constant 0 : i32
    %c0_i32_0 = arith.constant 0 : i32
    %c0_i32_1 = arith.constant 0 : i32
    return %arg0, %c0_i32, %c0_i32_0 : i32, i32, i32
  }
}

</mosaic_0001>

<llo_original>
// kernel: tpu_custom_call.1
$region0: #{tpu_custom_call.1}
  #allocation0 [shape = 'u32[]', space=smem, size = 0x4, offset = 0x4, fixed_abs, tag = 'smem constant byte address 0x4 - core index']
  #allocation1 [shape = 'u32[144,128]{1,0:T(1,128)}', space=vmem, size = 0x12000, scoped, tag = 'internal scratch']
  %s0 = inlined_call_operand.vmem [shape: f32[16,8,1], index: 0, kind: input, shape index: {}]
  %s1 = inlined_call_operand.vmem [shape: f32[8,128], index: 1, kind: input, shape index: {}]
  %s2 = inlined_call_operand.vmem [shape: f32[1,128], index: 2, kind: input, shape index: {}]
  %s3 = inlined_call_operand.hbm [shape: f32[16,8,128], index: 3, kind: output, shape index: {}]
  %s4 = sld [smem:[#allocation0]]
  $region45: #{tpu_custom_call.1} parent=0
    _
  %s6 = ssub.s32 1, %s4
  %s7 = scalar_select 0, %s6, %s4
  $region1: #{tpu_custom_call.1} parent=0
    #allocation2 [shape = 'u8[65536]{0}', space=vmem, size = 0x10000, scoped, tag = 'output window, operand 0']
    #allocation3 [shape = 's32[2]{0}', space=sflag, size = 0x8, scoped, tag = 'scoped memory for tpu_custom_call.1']
    %8 = vsyncpa [#allocation3], 0
    %s9 = scalar_lea.sflag [#allocation3], 1
    %10 = vsyncpa %s9, 0
    loop: start=0, step=1, limit=4
    $region2: #{tpu_custom_call.1} parent=1 // loop_pre_header
      _
    $region3: #{tpu_custom_call.1} parent=1 // loop_header
      %s12 = sphi 0, %s16
      %p13 = scmp.ge.s32.totalorder %s12, 4
      %s22 = sphi 0, %s24
      %s25 = sphi 0, %s22
      %s26 = sphi 0, %s25
      %s42 = sphi 0, %s26
      %s46 = sphi 0, %s46
      %s48 = sphi 0, %s46
      %s49 = sphi 0, %s48
      %s63 = sphi 0, %s49
      %s67 = sphi 0, %s67
      %s69 = sphi 0, %s67
      %s70 = sphi 0, %s69
      %s84 = sphi 0, %s70
      %s90 = sphi 0, %s92
      %s93 = sphi 0, %s90
      %s94 = sphi 0, %s93
      %s110 = sphi 0, %s94
    $region4: #{tpu_custom_call.1} parent=1 // loop_header_branch
      %15 = sbr.rel (%p13) target = $region8
    $region5: #{tpu_custom_call.1} parent=1 // loop_body
      %s17 = ssub.s32 %s12, 1
      %s18 = ssub.s32 %s12, 2
      %s19 = sadd.s32 %s12, 1
      %s20 = ssub.s32 %s12, %s19
      %p21 = scmp.eq.s32.totalorder %s20, 0
      %s23 = sadd.s32 %s22, 1
      %s24 = scalar_select %p21, %s22, %s23
      %p27 = pneg %p21
      %p28 = scmp.eq.s32.totalorder %s12, 1
      %p29 = por %p27, %p28
      %p30 = scmp.ne.s32.totalorder %s22, %s25
      %p31 = scmp.eq.s32.totalorder %s12, 0
      %p32 = por %p30, %p31
      %p33 = scmp.ne.s32.totalorder %s22, %s25
      %p34 = scmp.eq.s32.totalorder %s17, 1
      %p35 = por %p33, %p34
      %p36 = scmp.ne.s32.totalorder %s25, %s26
      %p37 = scmp.eq.s32.totalorder %s17, 0
      %p38 = por %p36, %p37
      %p39 = scmp.ne.s32.totalorder %s25, %s26
      %p40 = scmp.eq.s32.totalorder %s18, 1
      %p41 = por %p39, %p40
      %p43 = scmp.ne.s32.totalorder %s26, %s42
      %p44 = scmp.eq.s32.totalorder %s18, 0
      %p45 = por %p43, %p44
      %s47 = sadd.s32 %s46, 1
      %p50 = scmp.eq.s32.totalorder %s12, 1
      %p51 = scmp.ne.s32.totalorder %s46, %s48
      %p52 = scmp.eq.s32.totalorder %s12, 0
      %p53 = por %p51, %p52
      %p54 = scmp.ne.s32.totalorder %s46, %s48
      %p55 = scmp.eq.s32.totalorder %s17, 1
      %p56 = por %p54, %p55
      %p57 = scmp.ne.s32.totalorder %s48, %s49
      %p58 = scmp.eq.s32.totalorder %s17, 0
      %p59 = por %p57, %p58
      %p60 = scmp.ne.s32.totalorder %s48, %s49
      %p61 = scmp.eq.s32.totalorder %s18, 1
      %p62 = por %p60, %p61
      %p64 = scmp.ne.s32.totalorder %s49, %s63
      %p65 = scmp.eq.s32.totalorder %s18, 0
      %p66 = por %p64, %p65
      %s68 = sadd.s32 %s67, 1
      %p71 = scmp.eq.s32.totalorder %s12, 1
      %p72 = scmp.ne.s32.totalorder %s67, %s69
      %p73 = scmp.eq.s32.totalorder %s12, 0
      %p74 = por %p72, %p73
      %p75 = scmp.ne.s32.totalorder %s67, %s69
      %p76 = scmp.eq.s32.totalorder %s17, 1
      %p77 = por %p75, %p76
      %p78 = scmp.ne.s32.totalorder %s69, %s70
      %p79 = scmp.eq.s32.totalorder %s17, 0
      %p80 = por %p78, %p79
      %p81 = scmp.ne.s32.totalorder %s69, %s70
      %p82 = scmp.eq.s32.totalorder %s18, 1
      %p83 = por %p81, %p82
      %p85 = scmp.ne.s32.totalorder %s70, %s84
      %p86 = scmp.eq.s32.totalorder %s18, 0
      %p87 = por %p85, %p86
      %s88 = ssub.s32 %s12, %s19
      %p89 = scmp.eq.s32.totalorder %s88, 0
      %s91 = sadd.s32 %s90, 1
      %s92 = scalar_select %p89, %s90, %s91
      %p95 = pneg %p89
      %p96 = scmp.eq.s32.totalorder %s12, 1
      %p97 = por %p95, %p96
      %p98 = scmp.ne.s32.totalorder %s90, %s93
      %p99 = scmp.eq.s32.totalorder %s12, 0
      %p100 = por %p98, %p99
      %p101 = scmp.ne.s32.totalorder %s90, %s93
      %p102 = scmp.eq.s32.totalorder %s17, 1
      %p103 = por %p101, %p102
      %p104 = scmp.ne.s32.totalorder %s93, %s94
      %p105 = scmp.eq.s32.totalorder %s17, 0
      %p106 = por %p104, %p105
      %p107 = scmp.ne.s32.totalorder %s93, %s94
      %p108 = scmp.eq.s32.totalorder %s18, 1
      %p109 = por %p107, %p108
      %p111 = scmp.ne.s32.totalorder %s94, %s110
      %p112 = scmp.eq.s32.totalorder %s18, 0
      %p113 = por %p111, %p112
      %p114 = scmp.le.s32.totalorder 1, %s12
      %p115 = scmp.lt.s32.totalorder %s12, 3
      %p116 = pnand %p114, %p115
      %p117 = pneg %p116
      // Predicated region
      $region9: #{tpu_custom_call.1} parent=5 // pred_check
        _
      $region10: #{tpu_custom_call.1} parent=5 // pred_check_branch
        %119 = sbr.rel (%p116) target = $region12
      $region11: #{tpu_custom_call.1} parent=5 // pred_region
        %s120 = ssub.s32 %s12, 1
        // Predicated region
        $region13: #{tpu_custom_call.1} parent=11 // pred_check
          %p121 = pneg %p59
        $region14: #{tpu_custom_call.1} parent=11 // pred_check_branch
          %123 = sbr.rel (%p121) target = $region16
        $region15: #{tpu_custom_call.1} parent=11 // pred_region
          _
        $region16: #{tpu_custom_call.1} parent=11 // pred_fallthru
          _
        // Predicated region
        $region17: #{tpu_custom_call.1} parent=11 // pred_check
          %p124 = pneg %p80
        $region18: #{tpu_custom_call.1} parent=11 // pred_check_branch
          %126 = sbr.rel (%p124) target = $region20
        $region19: #{tpu_custom_call.1} parent=11 // pred_region
          _
        $region20: #{tpu_custom_call.1} parent=11 // pred_fallthru
          _
      $region12: #{tpu_custom_call.1} parent=5 // pred_fallthru
        _
      %p127 = scmp.lt.s32.totalorder %s12, 2
      // Predicated region
      $region21: #{tpu_custom_call.1} parent=5 // pred_check
        %p128 = pneg %p127
      $region22: #{tpu_custom_call.1} parent=5 // pred_check_branch
        %130 = sbr.rel (%p128) target = $region24
      $region23: #{tpu_custom_call.1} parent=5 // pred_region
        // Predicated region
        $region25: #{tpu_custom_call.1} parent=23 // pred_check
          %p131 = pneg %p32
        $region26: #{tpu_custom_call.1} parent=23 // pred_check_branch
          %133 = sbr.rel (%p131) target = $region28
        $region27: #{tpu_custom_call.1} parent=23 // pred_region
          %s134 = smul.u32 8, %s12
          %p135 = scmp.lt.s32.totalorder %s134, 15
          %s136 = scalar_select %p135, %s134, 15
          %s137 = smul.addr %s136, 8
          %s138 = scalar_lea.vmem %s0, %s137
          %s139 = smul.u32 8, %s12
        $region28: #{tpu_custom_call.1} parent=23 // pred_fallthru
          _
      $region24: #{tpu_custom_call.1} parent=5 // pred_fallthru
        _
      %p140 = scmp.le.s32.totalorder 1, %s12
      %p141 = scmp.lt.s32.totalorder %s12, 3
      %p142 = pnand %p140, %p141
      %p143 = pneg %p142
      // Predicated region
      $region29: #{tpu_custom_call.1} parent=5 // pred_check
        _
      $region30: #{tpu_custom_call.1} parent=5 // pred_check_branch
        %145 = sbr.rel (%p142) target = $region32
      $region31: #{tpu_custom_call.1} parent=5 // pred_region
        %s146 = ssub.s32 %s12, 1
        %s147 = smul.u32 8, %s17
        %p148 = scmp.lt.s32.totalorder %s147, 15
        %s149 = scalar_select %p148, %s147, 15
        %s150 = smul.addr %s149, 8
        %s151 = scalar_lea.vmem %s0, %s150
        %p152 = pneg %p38
        %p153 = pneg %p35
        %p154 = pneg %p59
        %p155 = pneg %p56
        %p156 = pneg %p80
        %p157 = pneg %p77
        %p158 = pneg %p106
        %p159 = pneg %p103
        %s160 = sand.u32 %s93, 1
        %s161 = scalar_lea.sflag [#allocation3], %s160
        %s162 = sand.u32 %s93, 1
        %s163 = smul.addr %s162, 64
        %s164 = scalar_lea.vmem [#allocation2], %s163
        %s165 = smul.u32 8, %s17
        %p166 = scmp.lt.s32.totalorder %s165, 15
        %s167 = scalar_select %p166, %s165, 15
        %s168 = smul.addr %s167, 8
        %s169 = scalar_lea.vmem %s0, %s168
        %s170 = smul.u32 8, %s17
        %s171 = smul.u32 8, %s17
        %v172 = vld [vmem:[%s169] sm:$0xff]
        %v173 = vld [vmem:[%s169 + $0x8] sm:$0xff]
        %v174 = vld [vmem:[%s169 + $0x10] sm:$0xff]
        %v175 = vld [vmem:[%s169 + $0x18] sm:$0xff]
        %v176 = vld [vmem:[%s169 + $0x20] sm:$0xff]
        %v177 = vld [vmem:[%s169 + $0x28] sm:$0xff]
        %v178 = vld [vmem:[%s169 + $0x30] sm:$0xff]
        %v179 = vld [vmem:[%s169 + $0x38] sm:$0xff]
        %v180 = vld [vmem:[%s1] sm:$0xff]
        %v181 = vld [vmem:[%s2] sm:$0x1]
        %183 = vset.pattern.permute.xlu0 0
        %184 = vperm.xlu0 %183, %v172
        %v185 = vpop.permute.xlu0 %184
        %188 = vset.pattern.permute.xlu0 0
        %189 = vperm.xlu0 %188, %v173
        %v190 = vpop.permute.xlu0 %189
        %193 = vset.pattern.permute.xlu0 0
        %194 = vperm.xlu0 %193, %v174
        %v195 = vpop.permute.xlu0 %194
        %198 = vset.pattern.permute.xlu0 0
        %199 = vperm.xlu0 %198, %v175
        %v200 = vpop.permute.xlu0 %199
        %203 = vset.pattern.permute.xlu0 0
        %204 = vperm.xlu0 %203, %v176
        %v205 = vpop.permute.xlu0 %204
        %208 = vset.pattern.permute.xlu0 0
        %209 = vperm.xlu0 %208, %v177
        %v210 = vpop.permute.xlu0 %209
        %213 = vset.pattern.permute.xlu0 0
        %214 = vperm.xlu0 %213, %v178
        %v215 = vpop.permute.xlu0 %214
        %218 = vset.pattern.permute.xlu0 0
        %219 = vperm.xlu0 %218, %v179
        %v220 = vpop.permute.xlu0 %219
        %v222 = vmul.f32 %v185, %v180
        %v223 = vmul.f32 %v190, %v180
        %v224 = vmul.f32 %v195, %v180
        %v225 = vmul.f32 %v200, %v180
        %v226 = vmul.f32 %v205, %v180
        %v227 = vmul.f32 %v210, %v180
        %v228 = vmul.f32 %v215, %v180
        %v229 = vmul.f32 %v220, %v180
        %v231 = vlaneseq
        %v232 = vshrl.u32 %v231, 7
        %v233 = vsub.s32 0, %v232
        %v234 = vrot.slane %v181, %v233
        %v236 = vadd.f32 %v222, %v234
        %v237 = vadd.f32 %v223, %v234
        %v238 = vadd.f32 %v224, %v234
        %v239 = vadd.f32 %v225, %v234
        %v240 = vadd.f32 %v226, %v234
        %v241 = vadd.f32 %v227, %v234
        %v242 = vadd.f32 %v228, %v234
        %v243 = vadd.f32 %v229, %v234
        %244 = vst [vmem:[%s164] sm:$0xff] %v236
        %245 = vst [vmem:[%s164 + $0x8] sm:$0xff] %v237
        %246 = vst [vmem:[%s164 + $0x10] sm:$0xff] %v238
        %247 = vst [vmem:[%s164 + $0x18] sm:$0xff] %v239
        %248 = vst [vmem:[%s164 + $0x20] sm:$0xff] %v240
        %249 = vst [vmem:[%s164 + $0x28] sm:$0xff] %v241
        %250 = vst [vmem:[%s164 + $0x30] sm:$0xff] %v242
        %251 = vst [vmem:[%s164 + $0x38] sm:$0xff] %v243
        %s252 = sand.u32 %s93, 1
        %s253 = scalar_lea.sflag [#allocation3], %s252
        %s254 = sand.u32 %s93, 1
        %s255 = smul.addr %s254, 64
        %s256 = scalar_lea.vmem [#allocation2], %s255
        // Predicated region
        $region33: #{tpu_custom_call.1} parent=31 // pred_check
          %p257 = pneg %p103
        $region34: #{tpu_custom_call.1} parent=31 // pred_check_branch
          %259 = sbr.rel (%p257) target = $region36
        $region35: #{tpu_custom_call.1} parent=31 // pred_region
          %s260 = smul.u32 8, %s17
          %s262 = ssub.s32 1024, 1024
          %263 = vsyncadd %s253, %s262
          %s264 = smul.addr %s260, 128
          %s265 = scalar_lea.hbm %s3, %s264
          %s266 = sshll.u32 %s256, 4
          %s267 = int_to_ptr.vmem [resolvable:$true] %s266
          %272 = dma.vmem_to_hbm [thread:$0]  %s267, 1024, %s265, %s253, 128, 128, 8
        $region36: #{tpu_custom_call.1} parent=31 // pred_fallthru
          _
      $region32: #{tpu_custom_call.1} parent=5 // pred_fallthru
        _
      %p273 = scmp.le.s32.totalorder 2, %s12
      // Predicated region
      $region37: #{tpu_custom_call.1} parent=5 // pred_check
        %p274 = pneg %p273
      $region38: #{tpu_custom_call.1} parent=5 // pred_check_branch
        %276 = sbr.rel (%p274) target = $region40
      $region39: #{tpu_custom_call.1} parent=5 // pred_region
        %s277 = ssub.s32 %s12, 2
        // Predicated region
        $region41: #{tpu_custom_call.1} parent=39 // pred_check
          %p278 = pneg %p109
        $region42: #{tpu_custom_call.1} parent=39 // pred_check_branch
          %280 = sbr.rel (%p278) target = $region44
        $region43: #{tpu_custom_call.1} parent=39 // pred_region
          %s281 = sand.u32 %s94, 1
          %s282 = scalar_lea.sflag [#allocation3], %s281
          %s283 = sand.u32 %s94, 1
          %s284 = smul.addr %s283, 64
          %s285 = scalar_lea.vmem [#allocation2], %s284
          %286 = dma.done %s282, 1024
        $region44: #{tpu_custom_call.1} parent=39 // pred_fallthru
          _
      $region40: #{tpu_custom_call.1} parent=5 // pred_fallthru
        _
    $region6: #{tpu_custom_call.1} parent=1 // loop_footer
      %s16 = sadd.s32 1, %s12
    $region7: #{tpu_custom_call.1} parent=1 // loop_footer_branch
      %11 = sbr.rel target = $region3
    $region8: #{tpu_custom_call.1} parent=1 // loop_exit
      _
    %287 = vsyncpa [#allocation3], 1
    %s288 = scalar_lea.sflag [#allocation3], 1
    %289 = vsyncpa %s288, 1

</llo_original>
